<compile_context>
chip_gen: v5e
topology: v5e:2x2
jax: 0.10.0
libtpu: 0.0.40
codegen_flags: <defaults>
</compile_context>

<pallas_src>
import numpy as np
import jax
import jax.numpy as jnp
from jax.experimental import pallas as pl
from jax.experimental.pallas import tpu as pltpu

LANE = 128
SUBLANE = 8

# ----------------------------------------------------------------------------
# Synthetic BioVNN hierarchy (replicates VNN_cell2._build_layers semantics)
# ----------------------------------------------------------------------------
OMIC_DIM = 4      # features per gene
INPUT_DIM = 6     # number of genes
OUTPUT_DIM = 2
NEURON_MIN = 10
NEURON_RATIO = 0.2

# child_map[i] lists children of gene-group i (global index j = i + INPUT_DIM).
# indices < INPUT_DIM are genes; >= INPUT_DIM are previously-built gene groups.
CHILD_MAP = [
    [0, 1, 2],        # group 0 (idx 6): genes only
    [3, 4, 5],        # group 1 (idx 7): genes only
    [2, 3, 6],        # group 2 (idx 8): mixed -> only combines group 6
    [7, 8],           # group 3 (idx 9): root, combines groups 7 and 8
]


def _round_up(x, m):
    return ((x + m - 1) // m) * m


def build_layers(child_map, input_dim, omic_dim, output_dim, key,
                 neuron_min=NEURON_MIN, neuron_ratio=NEURON_RATIO):
    """Deterministically builds per-group Linear parameters, mirroring
    VNN_cell2._build_layers (only_combine_child_gene_group=True)."""
    n_groups = len(child_map)
    out_features = {}     # global idx j -> out_features of that group's Linear
    params = {}           # i -> (W (in,out), b (1,out))
    only_combine = set()  # global idx j of groups that drop gene children
    build_order = []
    to_build = list(range(n_groups))
    while to_build:
        for i in list(to_build):
            j = i + input_dim
            children = child_map[i]
            child_feat = [z for z in children if z < input_dim]
            child_com = [z for z in children if z >= input_dim]
            if any(z not in out_features for z in child_com):
                continue  # some child group not built yet -> pass
            if len(child_com) > 0:  # only_combine_child_gene_group == True
                children_n = len(child_com)
                if i == n_groups - 1:
                    children_n = output_dim
                child_feat = []
                only_combine.add(j)
            else:
                children_n = len(children)
                if i == n_groups - 1:
                    children_n = output_dim
            neuron_n = max(neuron_min, int(children_n * neuron_ratio))
            total_in = len(child_feat) * omic_dim + sum(
                out_features[z] for z in child_com)
            k1, k2, key = jax.random.split(key, 3)
            bound = 1.0 / float(total_in) ** 0.5   # torch Linear default init
            W = jax.random.uniform(k1, (total_in, neuron_n), jnp.float32,
                                   -bound, bound)
            b = jax.random.uniform(k2, (1, neuron_n), jnp.float32,
                                   -bound, bound)
            params[i] = (W, b)
            out_features[j] = neuron_n
            to_build.remove(i)
            build_order.append(i)
    return params, build_order, only_combine, out_features


# ----------------------------------------------------------------------------
# Weight packing: scatter each group's Linear into a lane-dense slab matmul
# ----------------------------------------------------------------------------
def pack_weights(params, child_map, only_combine, out_features,
                 input_dim, omic_dim):
    """Build W_all (n_groups, K_PAD, OUT_PAD) so that for group i:
         group_act = mish(acts_slab @ W_all[i])
       where acts_slab holds [gene feats | bias-1 column | group activations]
       and the bias is folded into W_all's bias row."""
    n_groups = len(child_map)
    gene_feat = input_dim * omic_dim
    bias_col = gene_feat                         # constant-1 column
    gene_pad = _round_up(gene_feat + 1, LANE)
    out_pad = _round_up(max(out_features[g + input_dim]
                            for g in range(n_groups)), LANE)
    k_pad = gene_pad + n_groups * out_pad

    # TODO(synk): for very large hierarchies this scattered-K slab grows as
    # O(n_groups^2 * OUT_PAD); switch to level-packed block-diagonal weights or
    # scalar-prefetch-driven child gathers in that regime.
    w_all = np.zeros((n_groups, k_pad, out_pad), np.float32)
    for i in range(n_groups):
        W, b = params[i]
        W = np.asarray(W)
        b = np.asarray(b)
        out_i = W.shape[1]
        j = i + input_dim
        children = child_map[i]
        if j in only_combine:
            children = [z for z in children if z >= input_dim]
        r = 0
        for z in children:
            if z < input_dim:
                off, width = z * omic_dim, omic_dim
            else:
                off = gene_pad + (z - input_dim) * out_pad
                width = out_features[z]
            w_all[i, off:off + width, :out_i] = W[r:r + width, :]
            r += width
        w_all[i, bias_col, :out_i] = b[0]        # fold bias into the slab

    layout = dict(gene_feat=gene_feat, bias_col=bias_col, gene_pad=gene_pad,
                  out_pad=out_pad, k_pad=k_pad, n_groups=n_groups,
                  root_out=out_features[input_dim + n_groups - 1])
    return jnp.asarray(w_all), layout


# ----------------------------------------------------------------------------
# Fused Pallas kernel: whole DAG in one call, activations resident in VMEM
# ----------------------------------------------------------------------------
def make_fused_kernel(build_order, layout):
    gene_pad = layout["gene_pad"]
    out_pad = layout["out_pad"]
    n_groups = layout["n_groups"]
    root_off = gene_pad + (n_groups - 1) * out_pad

    def kernel(x_ref, w_ref, o_ref, acts_ref):
        # Activation slab layout (columns):
        #   [0 : gene_pad)                          gene feats + bias-1 column
        #   [gene_pad + g*out_pad : +out_pad)       activations of group g
        acts_ref[...] = jnp.zeros_like(acts_ref)
        acts_ref[:, :gene_pad] = x_ref[...]

        # Topological DAG walk, statically unrolled (build_order is known at
        # trace time).  Child selection/concat is baked into the scattered
        # weight slab, so each group is one (B,K_PAD)@(K_PAD,OUT_PAD) matmul.
        for i in build_order:
            w = w_ref[i]                                   # (K_PAD, OUT_PAD)
            y = jnp.dot(acts_ref[...], w,
                        preferred_element_type=jnp.float32)
            # Mish = y * tanh(softplus(y)), single-exp formulation:
            #   tanh(log(1+e^y)) = ((1+e^y)^2 - 1) / ((1+e^y)^2 + 1)
            # with PyTorch's softplus threshold=20 saturation.
            t = 1.0 + jnp.exp(jnp.minimum(y, 20.0))
            tt = t * t
            ratio = (tt - 1.0) * pl.reciprocal(tt + 1.0, approx=True)
            act = jnp.where(y > 20.0, y, y * ratio)
            # TODO(synk): nn.Dropout(p=0.5) is identity in eval mode; training
            # -time stochastic dropout is intentionally not reproduced here.
            off = gene_pad + i * out_pad
            acts_ref[:, off:off + out_pad] = act

        # forward() returns features[-1] == activations of the last gene group.
        o_ref[...] = acts_ref[:, root_off:root_off + out_pad]

    return kernel


def vnn_forward_fused(features, w_all, layout, build_order):
    """features: (B, input_dim, omic_dim) float32 -> (B, root_out) float32."""
    B = features.shape[0]
    gene_feat = layout["gene_feat"]
    gene_pad = layout["gene_pad"]
    out_pad = layout["out_pad"]
    k_pad = layout["k_pad"]
    n_groups = layout["n_groups"]

    b_tile = SUBLANE
    b_pad = _round_up(max(B, b_tile), b_tile)

    x_flat = features.reshape(B, gene_feat).astype(jnp.float32)
    xp = jnp.zeros((b_pad, gene_pad), jnp.float32)
    xp = xp.at[:B, :gene_feat].set(x_flat)
    xp = xp.at[:, layout["bias_col"]].set(1.0)   # folded-bias constant column

    kernel = make_fused_kernel(build_order, layout)
    out = pl.pallas_call(
        kernel,
        out_shape=jax.ShapeDtypeStruct((b_pad, out_pad), jnp.float32),
        grid_spec=pltpu.PrefetchScalarGridSpec(
            num_scalar_prefetch=0,
            grid=(b_pad // b_tile,),    # batch axis -> megacore-parallel on v7x
            in_specs=[
                pl.BlockSpec((b_tile, gene_pad), lambda b: (b, 0)),
                pl.BlockSpec((n_groups, k_pad, out_pad), lambda b: (0, 0, 0)),
            ],
            out_specs=pl.BlockSpec((b_tile, out_pad), lambda b: (b, 0)),
            scratch_shapes=[pltpu.VMEM((b_tile, k_pad), jnp.float32)],
        ),
        compiler_params=pltpu.CompilerParams(
            dimension_semantics=("parallel",)),
    )(xp, w_all)
    return out[:B, :layout["root_out"]]


# ----------------------------------------------------------------------------
# Pure-JAX reference of the original per-group forward (for correctness check)
# ----------------------------------------------------------------------------
def vnn_forward_ref(features, params, build_order, child_map, only_combine,
                    input_dim):
    feats = [features[:, g, :] for g in range(input_dim)]
    feats = feats + [None] * len(build_order)
    for i in build_order:
        j = i + input_dim
        children = child_map[i]
        if j in only_combine:
            children = [z for z in children if z >= input_dim]
        x = jnp.concatenate([feats[z] for z in children], axis=1)
        W, b = params[i]
        y = x @ W + b
        sp = jnp.where(y > 20.0, y, jnp.log1p(jnp.exp(jnp.minimum(y, 20.0))))
        feats[j] = y * jnp.tanh(sp)               # exact Mish
    return feats[input_dim + len(child_map) - 1]


if __name__ == "__main__":
    key = jax.random.PRNGKey(0)
    k_param, k_data = jax.random.split(key)

    params, build_order, only_combine, out_features = build_layers(
        CHILD_MAP, INPUT_DIM, OMIC_DIM, OUTPUT_DIM, k_param)

    w_all, layout = pack_weights(params, CHILD_MAP, only_combine, out_features,
                                 INPUT_DIM, OMIC_DIM)

    batch = 2
    features = jax.random.normal(k_data, (batch, INPUT_DIM, OMIC_DIM),
                                 dtype=jnp.float32)

    out = vnn_forward_fused(features, w_all, layout, build_order)
    out = jax.block_until_ready(out)

    ref = vnn_forward_ref(features, params, build_order, CHILD_MAP,
                          only_combine, INPUT_DIM)
    assert out.shape == ref.shape, (out.shape, ref.shape)
    # Tolerance accounts for the EUP approximate reciprocal used in fused Mish.
    err = float(jnp.max(jnp.abs(out - ref)))
    assert err < 5e-3, err

    print("KERNEL_OK")
</pallas_src>

<mosaic_0001>
module attributes {stable_mosaic.version = 11 : i64} {
  func.func @kernel(%arg0: i32, %arg1: memref<8x128xf32, #tpu.memory_space<vmem>>, %arg2: memref<4x640x128xf32, #tpu.memory_space<vmem>>, %arg3: memref<8x128xf32, #tpu.memory_space<vmem>>, %arg4: memref<8x640xf32, #tpu.memory_space<vmem>>) attributes {dimension_semantics = [#tpu.dimension_semantics<parallel>], iteration_bounds = array<i64: 1>, scalar_prefetch = 0 : i64, scratch_operands = 1 : i64, tpu.core_type = #tpu.core_type<tc>, window_params = [{transform_indices = @transform_0, window_bounds = array<i64: 8, 128>}, {pipeline_mode = #tpu.pipeline_mode<synchronous>, transform_indices = @transform_1, window_bounds = array<i64: 4, 640, 128>}, {transform_indices = @transform_2, window_bounds = array<i64: 8, 128>}]} {
    %cst = arith.constant 0.000000e+00 : f32
    %0 = vector.broadcast %cst : f32 to vector<8x640xf32>
    %c0 = arith.constant 0 : index
    %c0_0 = arith.constant 0 : index
    %1 = vector.load %arg4[%c0, %c0_0] : memref<8x640xf32, #tpu.memory_space<vmem>>, vector<8x640xf32>
    tpu.vector_store %arg4[%c0, %c0_0], %0 {strides = array<i32>} : memref<8x640xf32, #tpu.memory_space<vmem>>, vector<8x640xf32>,
    %c0_1 = arith.constant 0 : index
    %c0_2 = arith.constant 0 : index
    %2 = vector.load %arg1[%c0_1, %c0_2] : memref<8x128xf32, #tpu.memory_space<vmem>>, vector<8x128xf32>
    %c0_3 = arith.constant 0 : index
    %c0_4 = arith.constant 0 : index
    %3 = vector.load %arg4[%c0_3, %c0_4] : memref<8x640xf32, #tpu.memory_space<vmem>>, vector<8x128xf32>
    tpu.vector_store %arg4[%c0_3, %c0_4], %2 {strides = array<i32>} : memref<8x640xf32, #tpu.memory_space<vmem>>, vector<8x128xf32>,
    %c0_5 = arith.constant 0 : index
    %c0_6 = arith.constant 0 : index
    %c0_7 = arith.constant 0 : index
    %4 = vector.load %arg2[%c0_5, %c0_6, %c0_7] : memref<4x640x128xf32, #tpu.memory_space<vmem>>, vector<1x640x128xf32>
    %5 = vector.shape_cast %4 : vector<1x640x128xf32> to vector<640x128xf32>
    %c0_8 = arith.constant 0 : index
    %c0_9 = arith.constant 0 : index
    %6 = vector.load %arg4[%c0_8, %c0_9] : memref<8x640xf32, #tpu.memory_space<vmem>>, vector<8x640xf32>
    %cst_10 = arith.constant dense<0.000000e+00> : vector<8x128xf32>
    %7 = tpu.matmul %6, %5, %cst_10 {dimension_numbers = #tpu.dot_dimension_numbers<[1], [0], [0], [1], [0, 0, 1, 1], [], []>} : vector<8x640xf32>, vector<640x128xf32>, vector<8x128xf32> -> vector<8x128xf32>
    %cst_11 = arith.constant 2.000000e+01 : f32
    %8 = vector.broadcast %cst_11 : f32 to vector<8x128xf32>
    %9 = arith.minimumf %7, %8 : vector<8x128xf32>
    %10 = math.exp %9 : vector<8x128xf32>
    %cst_12 = arith.constant 1.000000e+00 : f32
    %11 = vector.broadcast %cst_12 : f32 to vector<8x128xf32>
    %12 = arith.addf %11, %10 : vector<8x128xf32>
    %13 = arith.mulf %12, %12 : vector<8x128xf32>
    %cst_13 = arith.constant 1.000000e+00 : f32
    %14 = vector.broadcast %cst_13 : f32 to vector<8x128xf32>
    %15 = arith.subf %13, %14 : vector<8x128xf32>
    %cst_14 = arith.constant 1.000000e+00 : f32
    %16 = vector.broadcast %cst_14 : f32 to vector<8x128xf32>
    %17 = arith.addf %13, %16 : vector<8x128xf32>
    %18 = tpu.reciprocal %17 {approx = true} : vector<8x128xf32> -> vector<8x128xf32>
    %19 = arith.mulf %15, %18 : vector<8x128xf32>
    %cst_15 = arith.constant 2.000000e+01 : f32
    %20 = vector.broadcast %cst_15 : f32 to vector<8x128xf32>
    %21 = arith.cmpf ogt, %7, %20 : vector<8x128xf32>
    %22 = arith.mulf %7, %19 : vector<8x128xf32>
    %23 = arith.select %21, %7, %22 : vector<8x128xi1>, vector<8x128xf32>
    %c0_16 = arith.constant 0 : index
    %c128 = arith.constant 128 : index
    %24 = vector.load %arg4[%c0_16, %c128] : memref<8x640xf32, #tpu.memory_space<vmem>>, vector<8x128xf32>
    tpu.vector_store %arg4[%c0_16, %c128], %23 {strides = array<i32>} : memref<8x640xf32, #tpu.memory_space<vmem>>, vector<8x128xf32>,
    %c1 = arith.constant 1 : index
    %c0_17 = arith.constant 0 : index
    %c0_18 = arith.constant 0 : index
    %25 = vector.load %arg2[%c1, %c0_17, %c0_18] : memref<4x640x128xf32, #tpu.memory_space<vmem>>, vector<1x640x128xf32>
    %26 = vector.shape_cast %25 : vector<1x640x128xf32> to vector<640x128xf32>
    %c0_19 = arith.constant 0 : index
    %c0_20 = arith.constant 0 : index
    %27 = vector.load %arg4[%c0_19, %c0_20] : memref<8x640xf32, #tpu.memory_space<vmem>>, vector<8x640xf32>
    %cst_21 = arith.constant dense<0.000000e+00> : vector<8x128xf32>
    %28 = tpu.matmul %27, %26, %cst_21 {dimension_numbers = #tpu.dot_dimension_numbers<[1], [0], [0], [1], [0, 0, 1, 1], [], []>} : vector<8x640xf32>, vector<640x128xf32>, vector<8x128xf32> -> vector<8x128xf32>
    %cst_22 = arith.constant 2.000000e+01 : f32
    %29 = vector.broadcast %cst_22 : f32 to vector<8x128xf32>
    %30 = arith.minimumf %28, %29 : vector<8x128xf32>
    %31 = math.exp %30 : vector<8x128xf32>
    %cst_23 = arith.constant 1.000000e+00 : f32
    %32 = vector.broadcast %cst_23 : f32 to vector<8x128xf32>
    %33 = arith.addf %32, %31 : vector<8x128xf32>
    %34 = arith.mulf %33, %33 : vector<8x128xf32>
    %cst_24 = arith.constant 1.000000e+00 : f32
    %35 = vector.broadcast %cst_24 : f32 to vector<8x128xf32>
    %36 = arith.subf %34, %35 : vector<8x128xf32>
    %cst_25 = arith.constant 1.000000e+00 : f32
    %37 = vector.broadcast %cst_25 : f32 to vector<8x128xf32>
    %38 = arith.addf %34, %37 : vector<8x128xf32>
    %39 = tpu.reciprocal %38 {approx = true} : vector<8x128xf32> -> vector<8x128xf32>
    %40 = arith.mulf %36, %39 : vector<8x128xf32>
    %cst_26 = arith.constant 2.000000e+01 : f32
    %41 = vector.broadcast %cst_26 : f32 to vector<8x128xf32>
    %42 = arith.cmpf ogt, %28, %41 : vector<8x128xf32>
    %43 = arith.mulf %28, %40 : vector<8x128xf32>
    %44 = arith.select %42, %28, %43 : vector<8x128xi1>, vector<8x128xf32>
    %c0_27 = arith.constant 0 : index
    %c256 = arith.constant 256 : index
    %45 = vector.load %arg4[%c0_27, %c256] : memref<8x640xf32, #tpu.memory_space<vmem>>, vector<8x128xf32>
    tpu.vector_store %arg4[%c0_27, %c256], %44 {strides = array<i32>} : memref<8x640xf32, #tpu.memory_space<vmem>>, vector<8x128xf32>,
    %c2 = arith.constant 2 : index
    %c0_28 = arith.constant 0 : index
    %c0_29 = arith.constant 0 : index
    %46 = vector.load %arg2[%c2, %c0_28, %c0_29] : memref<4x640x128xf32, #tpu.memory_space<vmem>>, vector<1x640x128xf32>
    %47 = vector.shape_cast %46 : vector<1x640x128xf32> to vector<640x128xf32>
    %c0_30 = arith.constant 0 : index
    %c0_31 = arith.constant 0 : index
    %48 = vector.load %arg4[%c0_30, %c0_31] : memref<8x640xf32, #tpu.memory_space<vmem>>, vector<8x640xf32>
    %cst_32 = arith.constant dense<0.000000e+00> : vector<8x128xf32>
    %49 = tpu.matmul %48, %47, %cst_32 {dimension_numbers = #tpu.dot_dimension_numbers<[1], [0], [0], [1], [0, 0, 1, 1], [], []>} : vector<8x640xf32>, vector<640x128xf32>, vector<8x128xf32> -> vector<8x128xf32>
    %cst_33 = arith.constant 2.000000e+01 : f32
    %50 = vector.broadcast %cst_33 : f32 to vector<8x128xf32>
    %51 = arith.minimumf %49, %50 : vector<8x128xf32>
    %52 = math.exp %51 : vector<8x128xf32>
    %cst_34 = arith.constant 1.000000e+00 : f32
    %53 = vector.broadcast %cst_34 : f32 to vector<8x128xf32>
    %54 = arith.addf %53, %52 : vector<8x128xf32>
    %55 = arith.mulf %54, %54 : vector<8x128xf32>
    %cst_35 = arith.constant 1.000000e+00 : f32
    %56 = vector.broadcast %cst_35 : f32 to vector<8x128xf32>
    %57 = arith.subf %55, %56 : vector<8x128xf32>
    %cst_36 = arith.constant 1.000000e+00 : f32
    %58 = vector.broadcast %cst_36 : f32 to vector<8x128xf32>
    %59 = arith.addf %55, %58 : vector<8x128xf32>
    %60 = tpu.reciprocal %59 {approx = true} : vector<8x128xf32> -> vector<8x128xf32>
    %61 = arith.mulf %57, %60 : vector<8x128xf32>
    %cst_37 = arith.constant 2.000000e+01 : f32
    %62 = vector.broadcast %cst_37 : f32 to vector<8x128xf32>
    %63 = arith.cmpf ogt, %49, %62 : vector<8x128xf32>
    %64 = arith.mulf %49, %61 : vector<8x128xf32>
    %65 = arith.select %63, %49, %64 : vector<8x128xi1>, vector<8x128xf32>
    %c0_38 = arith.constant 0 : index
    %c384 = arith.constant 384 : index
    %66 = vector.load %arg4[%c0_38, %c384] : memref<8x640xf32, #tpu.memory_space<vmem>>, vector<8x128xf32>
    tpu.vector_store %arg4[%c0_38, %c384], %65 {strides = array<i32>} : memref<8x640xf32, #tpu.memory_space<vmem>>, vector<8x128xf32>,
    %c3 = arith.constant 3 : index
    %c0_39 = arith.constant 0 : index
    %c0_40 = arith.constant 0 : index
    %67 = vector.load %arg2[%c3, %c0_39, %c0_40] : memref<4x640x128xf32, #tpu.memory_space<vmem>>, vector<1x640x128xf32>
    %68 = vector.shape_cast %67 : vector<1x640x128xf32> to vector<640x128xf32>
    %c0_41 = arith.constant 0 : index
    %c0_42 = arith.constant 0 : index
    %69 = vector.load %arg4[%c0_41, %c0_42] : memref<8x640xf32, #tpu.memory_space<vmem>>, vector<8x640xf32>
    %cst_43 = arith.constant dense<0.000000e+00> : vector<8x128xf32>
    %70 = tpu.matmul %69, %68, %cst_43 {dimension_numbers = #tpu.dot_dimension_numbers<[1], [0], [0], [1], [0, 0, 1, 1], [], []>} : vector<8x640xf32>, vector<640x128xf32>, vector<8x128xf32> -> vector<8x128xf32>
    %cst_44 = arith.constant 2.000000e+01 : f32
    %71 = vector.broadcast %cst_44 : f32 to vector<8x128xf32>
    %72 = arith.minimumf %70, %71 : vector<8x128xf32>
    %73 = math.exp %72 : vector<8x128xf32>
    %cst_45 = arith.constant 1.000000e+00 : f32
    %74 = vector.broadcast %cst_45 : f32 to vector<8x128xf32>
    %75 = arith.addf %74, %73 : vector<8x128xf32>
    %76 = arith.mulf %75, %75 : vector<8x128xf32>
    %cst_46 = arith.constant 1.000000e+00 : f32
    %77 = vector.broadcast %cst_46 : f32 to vector<8x128xf32>
    %78 = arith.subf %76, %77 : vector<8x128xf32>
    %cst_47 = arith.constant 1.000000e+00 : f32
    %79 = vector.broadcast %cst_47 : f32 to vector<8x128xf32>
    %80 = arith.addf %76, %79 : vector<8x128xf32>
    %81 = tpu.reciprocal %80 {approx = true} : vector<8x128xf32> -> vector<8x128xf32>
    %82 = arith.mulf %78, %81 : vector<8x128xf32>
    %cst_48 = arith.constant 2.000000e+01 : f32
    %83 = vector.broadcast %cst_48 : f32 to vector<8x128xf32>
    %84 = arith.cmpf ogt, %70, %83 : vector<8x128xf32>
    %85 = arith.mulf %70, %82 : vector<8x128xf32>
    %86 = arith.select %84, %70, %85 : vector<8x128xi1>, vector<8x128xf32>
    %c0_49 = arith.constant 0 : index
    %c512 = arith.constant 512 : index
    %87 = vector.load %arg4[%c0_49, %c512] : memref<8x640xf32, #tpu.memory_space<vmem>>, vector<8x128xf32>
    tpu.vector_store %arg4[%c0_49, %c512], %86 {strides = array<i32>} : memref<8x640xf32, #tpu.memory_space<vmem>>, vector<8x128xf32>,
    %c0_50 = arith.constant 0 : index
    %c512_51 = arith.constant 512 : index
    %88 = vector.load %arg4[%c0_50, %c512_51] : memref<8x640xf32, #tpu.memory_space<vmem>>, vector<8x128xf32>
    %c0_52 = arith.constant 0 : index
    %c0_53 = arith.constant 0 : index
    %89 = vector.load %arg3[%c0_52, %c0_53] : memref<8x128xf32, #tpu.memory_space<vmem>>, vector<8x128xf32>
    tpu.vector_store %arg3[%c0_52, %c0_53], %88 {strides = array<i32>} : memref<8x128xf32, #tpu.memory_space<vmem>>, vector<8x128xf32>,
    return
  }
  func.func @transform_0(%arg0: i32) -> (i32, i32) {
    %c0_i32 = arith.constant 0 : i32
    %c0_i32_0 = arith.constant 0 : i32
    return %arg0, %c0_i32 : i32, i32
  }
  func.func @transform_1(%arg0: i32) -> (i32, i32, i32) {
    %c0_i32 = arith.constant 0 : i32
    %c0_i32_0 = arith.constant 0 : i32
    %c0_i32_1 = arith.constant 0 : i32
    %c0_i32_2 = arith.constant 0 : i32
    return %c0_i32, %c0_i32_0, %c0_i32_1 : i32, i32, i32
  }
  func.func @transform_2(%arg0: i32) -> (i32, i32) {
    %c0_i32 = arith.constant 0 : i32
    %c0_i32_0 = arith.constant 0 : i32
    return %arg0, %c0_i32 : i32, i32
  }
}

</mosaic_0001>

<llo_original>
// kernel: tpu_custom_call.1
$region0: #{tpu_custom_call.1}
  #allocation0 [shape = 'u32[]', space=smem, size = 0x4, offset = 0x4, fixed_abs, tag = 'smem constant byte address 0x4 - core index']
  #allocation1 [shape = 'u32[72,128]{1,0:T(1,128)}', space=vmem, size = 0x9000, scoped, tag = 'internal scratch']
  #allocation2 [shape = 'f32[8,640]{1,0:T(8,128)}', space=vmem, size = 0x5000, scoped, tag = 'scratch operand']
  %s0 = inlined_call_operand.hbm [shape: f32[8,128], index: 0, kind: input, shape index: {}]
  %s1 = inlined_call_operand.hbm [shape: f32[4,640,128], index: 1, kind: input, shape index: {}]
  %s2 = inlined_call_operand.hbm [shape: f32[8,128], index: 2, kind: output, shape index: {}]
  %s3 = sld [smem:[#allocation0]]
  $region26: #{tpu_custom_call.1} parent=0
    _
  %s5 = ssub.s32 1, %s3
  %s6 = scalar_select 0, %s5, %s3
  $region1: #{tpu_custom_call.1} parent=0
    #allocation3 [shape = 'u8[4096]{0}', space=vmem, size = 0x1000, scoped, tag = 'input window, operand 0, single buffered']
    #allocation4 [shape = 's32[1]{0}', space=sflag, size = 0x4, scoped, tag = 'scoped memory for tpu_custom_call.1']
    #allocation5 [shape = 's32[1]{0}', space=sflag, size = 0x4, scoped, tag = 'scoped memory for tpu_custom_call.1']
    #allocation6 [shape = 'u8[1310720]{0}', space=vmem, size = 0x140000, scoped, tag = 'input window, operand 1, single buffered']
    #allocation7 [shape = 's32[1]{0}', space=sflag, size = 0x4, scoped, tag = 'scoped memory for tpu_custom_call.1']
    #allocation8 [shape = 'u8[4096]{0}', space=vmem, size = 0x1000, scoped, tag = 'output window, operand 0, single buffered']
    %7 = vsyncpa [#allocation4], 0
    %8 = vsyncpa [#allocation7], 0
    %9 = vsyncpa [#allocation5], 0
    // Predicated region
    $region2: #{tpu_custom_call.1} parent=1 // pred_check
      _
    $region3: #{tpu_custom_call.1} parent=1 // pred_check_branch
      %11 = sbr.rel (0) target = $region5
    $region4: #{tpu_custom_call.1} parent=1 // pred_region
      %13 = vsyncadd [#allocation4], 0
      %s15 = sshll.u32 %s0, 4
      %s16 = int_to_ptr.hbm [resolvable:$true] %s15
      %s17 = sshll.u32 [#allocation3], 4
      %s18 = int_to_ptr.vmem [resolvable:$true] %s17
      %20 = dma.hbm_to_vmem [thread:$0]  %s16, 128, %s18, [#allocation4]
    $region5: #{tpu_custom_call.1} parent=1 // pred_fallthru
      _
    // Predicated region
    $region6: #{tpu_custom_call.1} parent=1 // pred_check
      _
    $region7: #{tpu_custom_call.1} parent=1 // pred_check_branch
      %22 = sbr.rel (0) target = $region9
    $region8: #{tpu_custom_call.1} parent=1 // pred_region
      %24 = vsyncadd [#allocation7], 0
      %s25 = sshll.u32 %s1, 4
      %s26 = int_to_ptr.hbm [resolvable:$true] %s25
      %s27 = sshll.u32 [#allocation6], 4
      %s28 = int_to_ptr.vmem [resolvable:$true] %s27
      %33 = dma.hbm_to_vmem [thread:$0]  %s26, 40960, %s28, [#allocation7], 128, 128, 8
    $region9: #{tpu_custom_call.1} parent=1 // pred_fallthru
      _
    // Predicated region
    $region10: #{tpu_custom_call.1} parent=1 // pred_check
      _
    $region11: #{tpu_custom_call.1} parent=1 // pred_check_branch
      %35 = sbr.rel (0) target = $region13
    $region12: #{tpu_custom_call.1} parent=1 // pred_region
      %37 = dma.done [#allocation4], 128
    $region13: #{tpu_custom_call.1} parent=1 // pred_fallthru
      _
    // Predicated region
    $region14: #{tpu_custom_call.1} parent=1 // pred_check
      _
    $region15: #{tpu_custom_call.1} parent=1 // pred_check_branch
      %39 = sbr.rel (0) target = $region17
    $region16: #{tpu_custom_call.1} parent=1 // pred_region
      %41 = dma.done [#allocation7], 40960
    $region17: #{tpu_custom_call.1} parent=1 // pred_fallthru
      _
    %42 = vst [vmem:[#allocation2] sm:$0xff] 0.0
    %43 = vst [vmem:[#allocation2 + $0x8] sm:$0xff] 0.0
    %44 = vst [vmem:[#allocation2 + $0x10] sm:$0xff] 0.0
    %45 = vst [vmem:[#allocation2 + $0x18] sm:$0xff] 0.0
    %46 = vst [vmem:[#allocation2 + $0x20] sm:$0xff] 0.0
    %v47 = vld [vmem:[#allocation3] sm:$0xff]
    %48 = vst [vmem:[#allocation2] sm:$0xff] %v47
    %v49 = vld [vmem:[#allocation6] sm:$0xff]
    %v50 = vld [vmem:[#allocation6 + $0x8] sm:$0xff]
    %v51 = vld [vmem:[#allocation6 + $0x10] sm:$0xff]
    %v52 = vld [vmem:[#allocation6 + $0x18] sm:$0xff]
    %v53 = vld [vmem:[#allocation6 + $0x20] sm:$0xff]
    %v54 = vld [vmem:[#allocation6 + $0x28] sm:$0xff]
    %v55 = vld [vmem:[#allocation6 + $0x30] sm:$0xff]
    %v56 = vld [vmem:[#allocation6 + $0x38] sm:$0xff]
    %v57 = vld [vmem:[#allocation6 + $0x40] sm:$0xff]
    %v58 = vld [vmem:[#allocation6 + $0x48] sm:$0xff]
    %v59 = vld [vmem:[#allocation6 + $0x50] sm:$0xff]
    %v60 = vld [vmem:[#allocation6 + $0x58] sm:$0xff]
    %v61 = vld [vmem:[#allocation6 + $0x60] sm:$0xff]
    %v62 = vld [vmem:[#allocation6 + $0x68] sm:$0xff]
    %v63 = vld [vmem:[#allocation6 + $0x70] sm:$0xff]
    %v64 = vld [vmem:[#allocation6 + $0x78] sm:$0xff]
    %v65 = vld [vmem:[#allocation6 + $0x80] sm:$0xff]
    %v66 = vld [vmem:[#allocation6 + $0x88] sm:$0xff]
    %v67 = vld [vmem:[#allocation6 + $0x90] sm:$0xff]
    %v68 = vld [vmem:[#allocation6 + $0x98] sm:$0xff]
    %v69 = vld [vmem:[#allocation6 + $0xa0] sm:$0xff]
    %v70 = vld [vmem:[#allocation6 + $0xa8] sm:$0xff]
    %v71 = vld [vmem:[#allocation6 + $0xb0] sm:$0xff]
    %v72 = vld [vmem:[#allocation6 + $0xb8] sm:$0xff]
    %v73 = vld [vmem:[#allocation6 + $0xc0] sm:$0xff]
    %v74 = vld [vmem:[#allocation6 + $0xc8] sm:$0xff]
    %v75 = vld [vmem:[#allocation6 + $0xd0] sm:$0xff]
    %v76 = vld [vmem:[#allocation6 + $0xd8] sm:$0xff]
    %v77 = vld [vmem:[#allocation6 + $0xe0] sm:$0xff]
    %v78 = vld [vmem:[#allocation6 + $0xe8] sm:$0xff]
    %v79 = vld [vmem:[#allocation6 + $0xf0] sm:$0xff]
    %v80 = vld [vmem:[#allocation6 + $0xf8] sm:$0xff]
    %v81 = vld [vmem:[#allocation6 + $0x100] sm:$0xff]
    %v82 = vld [vmem:[#allocation6 + $0x108] sm:$0xff]
    %v83 = vld [vmem:[#allocation6 + $0x110] sm:$0xff]
    %v84 = vld [vmem:[#allocation6 + $0x118] sm:$0xff]
    %v85 = vld [vmem:[#allocation6 + $0x120] sm:$0xff]
    %v86 = vld [vmem:[#allocation6 + $0x128] sm:$0xff]
    %v87 = vld [vmem:[#allocation6 + $0x130] sm:$0xff]
    %v88 = vld [vmem:[#allocation6 + $0x138] sm:$0xff]
    %v89 = vld [vmem:[#allocation6 + $0x140] sm:$0xff]
    %v90 = vld [vmem:[#allocation6 + $0x148] sm:$0xff]
    %v91 = vld [vmem:[#allocation6 + $0x150] sm:$0xff]
    %v92 = vld [vmem:[#allocation6 + $0x158] sm:$0xff]
    %v93 = vld [vmem:[#allocation6 + $0x160] sm:$0xff]
    %v94 = vld [vmem:[#allocation6 + $0x168] sm:$0xff]
    %v95 = vld [vmem:[#allocation6 + $0x170] sm:$0xff]
    %v96 = vld [vmem:[#allocation6 + $0x178] sm:$0xff]
    %v97 = vld [vmem:[#allocation6 + $0x180] sm:$0xff]
    %v98 = vld [vmem:[#allocation6 + $0x188] sm:$0xff]
    %v99 = vld [vmem:[#allocation6 + $0x190] sm:$0xff]
    %v100 = vld [vmem:[#allocation6 + $0x198] sm:$0xff]
    %v101 = vld [vmem:[#allocation6 + $0x1a0] sm:$0xff]
    %v102 = vld [vmem:[#allocation6 + $0x1a8] sm:$0xff]
    %v103 = vld [vmem:[#allocation6 + $0x1b0] sm:$0xff]
    %v104 = vld [vmem:[#allocation6 + $0x1b8] sm:$0xff]
    %v105 = vld [vmem:[#allocation6 + $0x1c0] sm:$0xff]
    %v106 = vld [vmem:[#allocation6 + $0x1c8] sm:$0xff]
    %v107 = vld [vmem:[#allocation6 + $0x1d0] sm:$0xff]
    %v108 = vld [vmem:[#allocation6 + $0x1d8] sm:$0xff]
    %v109 = vld [vmem:[#allocation6 + $0x1e0] sm:$0xff]
    %v110 = vld [vmem:[#allocation6 + $0x1e8] sm:$0xff]
    %v111 = vld [vmem:[#allocation6 + $0x1f0] sm:$0xff]
    %v112 = vld [vmem:[#allocation6 + $0x1f8] sm:$0xff]
    %v113 = vld [vmem:[#allocation6 + $0x200] sm:$0xff]
    %v114 = vld [vmem:[#allocation6 + $0x208] sm:$0xff]
    %v115 = vld [vmem:[#allocation6 + $0x210] sm:$0xff]
    %v116 = vld [vmem:[#allocation6 + $0x218] sm:$0xff]
    %v117 = vld [vmem:[#allocation6 + $0x220] sm:$0xff]
    %v118 = vld [vmem:[#allocation6 + $0x228] sm:$0xff]
    %v119 = vld [vmem:[#allocation6 + $0x230] sm:$0xff]
    %v120 = vld [vmem:[#allocation6 + $0x238] sm:$0xff]
    %v121 = vld [vmem:[#allocation6 + $0x240] sm:$0xff]
    %v122 = vld [vmem:[#allocation6 + $0x248] sm:$0xff]
    %v123 = vld [vmem:[#allocation6 + $0x250] sm:$0xff]
    %v124 = vld [vmem:[#allocation6 + $0x258] sm:$0xff]
    %v125 = vld [vmem:[#allocation6 + $0x260] sm:$0xff]
    %v126 = vld [vmem:[#allocation6 + $0x268] sm:$0xff]
    %v127 = vld [vmem:[#allocation6 + $0x270] sm:$0xff]
    %v128 = vld [vmem:[#allocation6 + $0x278] sm:$0xff]
    %v129 = vld [vmem:[#allocation2] sm:$0xff]
    %v130 = vld [vmem:[#allocation2 + $0x8] sm:$0xff]
    %v131 = vld [vmem:[#allocation2 + $0x10] sm:$0xff]
    %v132 = vld [vmem:[#allocation2 + $0x18] sm:$0xff]
    %v133 = vld [vmem:[#allocation2 + $0x20] sm:$0xff]
    %134 = vmatpush.msra.mxu0 %v64
    %135 = vmatpush.msra.mxu0 %v63
    %136 = vmatpush.msra.mxu0 %v62
    %137 = vmatpush.msra.mxu0 %v61
    %138 = vmatpush.msra.mxu0 %v60
    %139 = vmatpush.msra.mxu0 %v59
    %140 = vmatpush.msra.mxu0 %v58
    %141 = vmatpush.msra.mxu0 %v57
    %142 = vmatpush.msra.mxu0 %v56
    %143 = vmatpush.msra.mxu0 %v55
    %144 = vmatpush.msra.mxu0 %v54
    %145 = vmatpush.msra.mxu0 %v53
    %146 = vmatpush.msra.mxu0 %v52
    %147 = vmatpush.msra.mxu0 %v51
    %148 = vmatpush.msra.mxu0 %v50
    %149 = vmatpush.msra.mxu0 %v49
    %150 = vmatmul.f32.gmra.mxu0 %v129
    %v151 = vpop.f32.mrf.mxu0
    %v152 = vadd.f32 0.0, %v151
    %153 = vdwg.mxu0
    %154 = vmatpush.msra.mxu0 %v80
    %155 = vmatpush.msra.mxu0 %v79
    %156 = vmatpush.msra.mxu0 %v78
    %157 = vmatpush.msra.mxu0 %v77
    %158 = vmatpush.msra.mxu0 %v76
    %159 = vmatpush.msra.mxu0 %v75
    %160 = vmatpush.msra.mxu0 %v74
    %161 = vmatpush.msra.mxu0 %v73
    %162 = vmatpush.msra.mxu0 %v72
    %163 = vmatpush.msra.mxu0 %v71
    %164 = vmatpush.msra.mxu0 %v70
    %165 = vmatpush.msra.mxu0 %v69
    %166 = vmatpush.msra.mxu0 %v68
    %167 = vmatpush.msra.mxu0 %v67
    %168 = vmatpush.msra.mxu0 %v66
    %169 = vmatpush.msra.mxu0 %v65
    %170 = vmatmul.f32.gmra.mxu0 %v130
    %v171 = vpop.f32.mrf.mxu0
    %v172 = vadd.f32 %v152, %v171
    %173 = vdwg.mxu0
    %174 = vmatpush.msra.mxu0 %v96
    %175 = vmatpush.msra.mxu0 %v95
    %176 = vmatpush.msra.mxu0 %v94
    %177 = vmatpush.msra.mxu0 %v93
    %178 = vmatpush.msra.mxu0 %v92
    %179 = vmatpush.msra.mxu0 %v91
    %180 = vmatpush.msra.mxu0 %v90
    %181 = vmatpush.msra.mxu0 %v89
    %182 = vmatpush.msra.mxu0 %v88
    %183 = vmatpush.msra.mxu0 %v87
    %184 = vmatpush.msra.mxu0 %v86
    %185 = vmatpush.msra.mxu0 %v85
    %186 = vmatpush.msra.mxu0 %v84
    %187 = vmatpush.msra.mxu0 %v83
    %188 = vmatpush.msra.mxu0 %v82
    %189 = vmatpush.msra.mxu0 %v81
    %190 = vmatmul.f32.gmra.mxu0 %v131
    %v191 = vpop.f32.mrf.mxu0
    %v192 = vadd.f32 %v172, %v191
    %193 = vdwg.mxu0
    %194 = vmatpush.msra.mxu0 %v112
    %195 = vmatpush.msra.mxu0 %v111
    %196 = vmatpush.msra.mxu0 %v110
    %197 = vmatpush.msra.mxu0 %v109
    %198 = vmatpush.msra.mxu0 %v108
    %199 = vmatpush.msra.mxu0 %v107
    %200 = vmatpush.msra.mxu0 %v106
    %201 = vmatpush.msra.mxu0 %v105
    %202 = vmatpush.msra.mxu0 %v104
    %203 = vmatpush.msra.mxu0 %v103
    %204 = vmatpush.msra.mxu0 %v102
    %205 = vmatpush.msra.mxu0 %v101
    %206 = vmatpush.msra.mxu0 %v100
    %207 = vmatpush.msra.mxu0 %v99
    %208 = vmatpush.msra.mxu0 %v98
    %209 = vmatpush.msra.mxu0 %v97
    %210 = vmatmul.f32.gmra.mxu0 %v132
    %v211 = vpop.f32.mrf.mxu0
    %v212 = vadd.f32 %v192, %v211
    %213 = vdwg.mxu0
    %214 = vmatpush.msra.mxu0 %v128
    %215 = vmatpush.msra.mxu0 %v127
    %216 = vmatpush.msra.mxu0 %v126
    %217 = vmatpush.msra.mxu0 %v125
    %218 = vmatpush.msra.mxu0 %v124
    %219 = vmatpush.msra.mxu0 %v123
    %220 = vmatpush.msra.mxu0 %v122
    %221 = vmatpush.msra.mxu0 %v121
    %222 = vmatpush.msra.mxu0 %v120
    %223 = vmatpush.msra.mxu0 %v119
    %224 = vmatpush.msra.mxu0 %v118
    %225 = vmatpush.msra.mxu0 %v117
    %226 = vmatpush.msra.mxu0 %v116
    %227 = vmatpush.msra.mxu0 %v115
    %228 = vmatpush.msra.mxu0 %v114
    %229 = vmatpush.msra.mxu0 %v113
    %230 = vmatmul.f32.gmra.mxu0 %v133
    %v231 = vpop.f32.mrf.mxu0
    %v232 = vadd.f32 %v212, %v231
    %233 = vdwg.mxu0
    %v234 = vmin.f32 %v232, 20.0
    %v235 = vmul.f32 %v234, 1.442695
    %v236 = vpow.pop %v235
    %v237 = vadd.f32 %v236, 1.0
    %v238 = vmul.f32 %v237, %v237
    %v239 = vsub.f32 %v238, 1.0
    %v240 = vadd.f32 %v238, 1.0
    %v241 = vrcp.pop %v240
    %v242 = vmul.f32 %v239, %v241
    %vm243 = vcmp.gt.f32.partialorder %v232, 20.0
    %v244 = vmul.f32 %v232, %v242
    %v245 = vsel %vm243, %v232, %v244
    %246 = vst [vmem:[#allocation2 + $0x8] sm:$0xff] %v245
    %s247 = scalar_lea.vmem [#allocation6], 640
    %v248 = vld [vmem:[%s247] sm:$0xff]
    %v249 = vld [vmem:[%s247 + $0x8] sm:$0xff]
    %v250 = vld [vmem:[%s247 + $0x10] sm:$0xff]
    %v251 = vld [vmem:[%s247 + $0x18] sm:$0xff]
    %v252 = vld [vmem:[%s247 + $0x20] sm:$0xff]
    %v253 = vld [vmem:[%s247 + $0x28] sm:$0xff]
    %v254 = vld [vmem:[%s247 + $0x30] sm:$0xff]
    %v255 = vld [vmem:[%s247 + $0x38] sm:$0xff]
    %v256 = vld [vmem:[%s247 + $0x40] sm:$0xff]
    %v257 = vld [vmem:[%s247 + $0x48] sm:$0xff]
    %v258 = vld [vmem:[%s247 + $0x50] sm:$0xff]
    %v259 = vld [vmem:[%s247 + $0x58] sm:$0xff]
    %v260 = vld [vmem:[%s247 + $0x60] sm:$0xff]
    %v261 = vld [vmem:[%s247 + $0x68] sm:$0xff]
    %v262 = vld [vmem:[%s247 + $0x70] sm:$0xff]
    %v263 = vld [vmem:[%s247 + $0x78] sm:$0xff]
    %v264 = vld [vmem:[%s247 + $0x80] sm:$0xff]
    %v265 = vld [vmem:[%s247 + $0x88] sm:$0xff]
    %v266 = vld [vmem:[%s247 + $0x90] sm:$0xff]
    %v267 = vld [vmem:[%s247 + $0x98] sm:$0xff]
    %v268 = vld [vmem:[%s247 + $0xa0] sm:$0xff]
    %v269 = vld [vmem:[%s247 + $0xa8] sm:$0xff]
    %v270 = vld [vmem:[%s247 + $0xb0] sm:$0xff]
    %v271 = vld [vmem:[%s247 + $0xb8] sm:$0xff]
    %v272 = vld [vmem:[%s247 + $0xc0] sm:$0xff]
    %v273 = vld [vmem:[%s247 + $0xc8] sm:$0xff]
    %v274 = vld [vmem:[%s247 + $0xd0] sm:$0xff]
    %v275 = vld [vmem:[%s247 + $0xd8] sm:$0xff]
    %v276 = vld [vmem:[%s247 + $0xe0] sm:$0xff]
    %v277 = vld [vmem:[%s247 + $0xe8] sm:$0xff]
    %v278 = vld [vmem:[%s247 + $0xf0] sm:$0xff]
    %v279 = vld [vmem:[%s247 + $0xf8] sm:$0xff]
    %v280 = vld [vmem:[%s247 + $0x100] sm:$0xff]
    %v281 = vld [vmem:[%s247 + $0x108] sm:$0xff]
    %v282 = vld [vmem:[%s247 + $0x110] sm:$0xff]
    %v283 = vld [vmem:[%s247 + $0x118] sm:$0xff]
    %v284 = vld [vmem:[%s247 + $0x120] sm:$0xff]
    %v285 = vld [vmem:[%s247 + $0x128] sm:$0xff]
    %v286 = vld [vmem:[%s247 + $0x130] sm:$0xff]
    %v287 = vld [vmem:[%s247 + $0x138] sm:$0xff]
    %v288 = vld [vmem:[%s247 + $0x140] sm:$0xff]
    %v289 = vld [vmem:[%s247 + $0x148] sm:$0xff]
    %v290 = vld [vmem:[%s247 + $0x150] sm:$0xff]
    %v291 = vld [vmem:[%s247 + $0x158] sm:$0xff]
    %v292 = vld [vmem:[%s247 + $0x160] sm:$0xff]
    %v293 = vld [vmem:[%s247 + $0x168] sm:$0xff]
    %v294 = vld [vmem:[%s247 + $0x170] sm:$0xff]
    %v295 = vld [vmem:[%s247 + $0x178] sm:$0xff]
    %v296 = vld [vmem:[%s247 + $0x180] sm:$0xff]
    %v297 = vld [vmem:[%s247 + $0x188] sm:$0xff]
    %v298 = vld [vmem:[%s247 + $0x190] sm:$0xff]
    %v299 = vld [vmem:[%s247 + $0x198] sm:$0xff]
    %v300 = vld [vmem:[%s247 + $0x1a0] sm:$0xff]
    %v301 = vld [vmem:[%s247 + $0x1a8] sm:$0xff]
    %v302 = vld [vmem:[%s247 + $0x1b0] sm:$0xff]
    %v303 = vld [vmem:[%s247 + $0x1b8] sm:$0xff]
    %v304 = vld [vmem:[%s247 + $0x1c0] sm:$0xff]
    %v305 = vld [vmem:[%s247 + $0x1c8] sm:$0xff]
    %v306 = vld [vmem:[%s247 + $0x1d0] sm:$0xff]
    %v307 = vld [vmem:[%s247 + $0x1d8] sm:$0xff]
    %v308 = vld [vmem:[%s247 + $0x1e0] sm:$0xff]
    %v309 = vld [vmem:[%s247 + $0x1e8] sm:$0xff]
    %v310 = vld [vmem:[%s247 + $0x1f0] sm:$0xff]
    %v311 = vld [vmem:[%s247 + $0x1f8] sm:$0xff]
    %v312 = vld [vmem:[%s247 + $0x200] sm:$0xff]
    %v313 = vld [vmem:[%s247 + $0x208] sm:$0xff]
    %v314 = vld [vmem:[%s247 + $0x210] sm:$0xff]
    %v315 = vld [vmem:[%s247 + $0x218] sm:$0xff]
    %v316 = vld [vmem:[%s247 + $0x220] sm:$0xff]
    %v317 = vld [vmem:[%s247 + $0x228] sm:$0xff]
    %v318 = vld [vmem:[%s247 + $0x230] sm:$0xff]
    %v319 = vld [vmem:[%s247 + $0x238] sm:$0xff]
    %v320 = vld [vmem:[%s247 + $0x240] sm:$0xff]
    %v321 = vld [vmem:[%s247 + $0x248] sm:$0xff]
    %v322 = vld [vmem:[%s247 + $0x250] sm:$0xff]
    %v323 = vld [vmem:[%s247 + $0x258] sm:$0xff]
    %v324 = vld [vmem:[%s247 + $0x260] sm:$0xff]
    %v325 = vld [vmem:[%s247 + $0x268] sm:$0xff]
    %v326 = vld [vmem:[%s247 + $0x270] sm:$0xff]
    %v327 = vld [vmem:[%s247 + $0x278] sm:$0xff]
    %v328 = vld [vmem:[#allocation2] sm:$0xff]
    %v329 = vld [vmem:[#allocation2 + $0x8] sm:$0xff]
    %v330 = vld [vmem:[#allocation2 + $0x10] sm:$0xff]
    %v331 = vld [vmem:[#allocation2 + $0x18] sm:$0xff]
    %v332 = vld [vmem:[#allocation2 + $0x20] sm:$0xff]
    %333 = vmatpush.msra.mxu0 %v263
    %334 = vmatpush.msra.mxu0 %v262
    %335 = vmatpush.msra.mxu0 %v261
    %336 = vmatpush.msra.mxu0 %v260
    %337 = vmatpush.msra.mxu0 %v259
    %338 = vmatpush.msra.mxu0 %v258
    %339 = vmatpush.msra.mxu0 %v257
    %340 = vmatpush.msra.mxu0 %v256
    %341 = vmatpush.msra.mxu0 %v255
    %342 = vmatpush.msra.mxu0 %v254
    %343 = vmatpush.msra.mxu0 %v253
    %344 = vmatpush.msra.mxu0 %v252
    %345 = vmatpush.msra.mxu0 %v251
    %346 = vmatpush.msra.mxu0 %v250
    %347 = vmatpush.msra.mxu0 %v249
    %348 = vmatpush.msra.mxu0 %v248
    %349 = vmatmul.f32.gmra.mxu0 %v328
    %v350 = vpop.f32.mrf.mxu0
    %v351 = vadd.f32 0.0, %v350
    %352 = vdwg.mxu0
    %353 = vmatpush.msra.mxu0 %v279
    %354 = vmatpush.msra.mxu0 %v278
    %355 = vmatpush.msra.mxu0 %v277
    %356 = vmatpush.msra.mxu0 %v276
    %357 = vmatpush.msra.mxu0 %v275
    %358 = vmatpush.msra.mxu0 %v274
    %359 = vmatpush.msra.mxu0 %v273
    %360 = vmatpush.msra.mxu0 %v272
    %361 = vmatpush.msra.mxu0 %v271
    %362 = vmatpush.msra.mxu0 %v270
    %363 = vmatpush.msra.mxu0 %v269
    %364 = vmatpush.msra.mxu0 %v268
    %365 = vmatpush.msra.mxu0 %v267
    %366 = vmatpush.msra.mxu0 %v266
    %367 = vmatpush.msra.mxu0 %v265
    %368 = vmatpush.msra.mxu0 %v264
    %369 = vmatmul.f32.gmra.mxu0 %v329
    %v370 = vpop.f32.mrf.mxu0
    %v371 = vadd.f32 %v351, %v370
    %372 = vdwg.mxu0
    %373 = vmatpush.msra.mxu0 %v295
    %374 = vmatpush.msra.mxu0 %v294
    %375 = vmatpush.msra.mxu0 %v293
    %376 = vmatpush.msra.mxu0 %v292
    %377 = vmatpush.msra.mxu0 %v291
    %378 = vmatpush.msra.mxu0 %v290
    %379 = vmatpush.msra.mxu0 %v289
    %380 = vmatpush.msra.mxu0 %v288
    %381 = vmatpush.msra.mxu0 %v287
    %382 = vmatpush.msra.mxu0 %v286
    %383 = vmatpush.msra.mxu0 %v285
    %384 = vmatpush.msra.mxu0 %v284
    %385 = vmatpush.msra.mxu0 %v283
    %386 = vmatpush.msra.mxu0 %v282
    %387 = vmatpush.msra.mxu0 %v281
    %388 = vmatpush.msra.mxu0 %v280
    %389 = vmatmul.f32.gmra.mxu0 %v330
    %v390 = vpop.f32.mrf.mxu0
    %v391 = vadd.f32 %v371, %v390
    %392 = vdwg.mxu0
    %393 = vmatpush.msra.mxu0 %v311
    %394 = vmatpush.msra.mxu0 %v310
    %395 = vmatpush.msra.mxu0 %v309
    %396 = vmatpush.msra.mxu0 %v308
    %397 = vmatpush.msra.mxu0 %v307
    %398 = vmatpush.msra.mxu0 %v306
    %399 = vmatpush.msra.mxu0 %v305
    %400 = vmatpush.msra.mxu0 %v304
    %401 = vmatpush.msra.mxu0 %v303
    %402 = vmatpush.msra.mxu0 %v302
    %403 = vmatpush.msra.mxu0 %v301
    %404 = vmatpush.msra.mxu0 %v300
    %405 = vmatpush.msra.mxu0 %v299
    %406 = vmatpush.msra.mxu0 %v298
    %407 = vmatpush.msra.mxu0 %v297
    %408 = vmatpush.msra.mxu0 %v296
    %409 = vmatmul.f32.gmra.mxu0 %v331
    %v410 = vpop.f32.mrf.mxu0
    %v411 = vadd.f32 %v391, %v410
    %412 = vdwg.mxu0
    %413 = vmatpush.msra.mxu0 %v327
    %414 = vmatpush.msra.mxu0 %v326
    %415 = vmatpush.msra.mxu0 %v325
    %416 = vmatpush.msra.mxu0 %v324
    %417 = vmatpush.msra.mxu0 %v323
    %418 = vmatpush.msra.mxu0 %v322
    %419 = vmatpush.msra.mxu0 %v321
    %420 = vmatpush.msra.mxu0 %v320
    %421 = vmatpush.msra.mxu0 %v319
    %422 = vmatpush.msra.mxu0 %v318
    %423 = vmatpush.msra.mxu0 %v317
    %424 = vmatpush.msra.mxu0 %v316
    %425 = vmatpush.msra.mxu0 %v315
    %426 = vmatpush.msra.mxu0 %v314
    %427 = vmatpush.msra.mxu0 %v313
    %428 = vmatpush.msra.mxu0 %v312
    %429 = vmatmul.f32.gmra.mxu0 %v332
    %v430 = vpop.f32.mrf.mxu0
    %v431 = vadd.f32 %v411, %v430
    %432 = vdwg.mxu0
    %v433 = vmin.f32 %v431, 20.0
    %v434 = vmul.f32 %v433, 1.442695
    %v435 = vpow.pop %v434
    %v436 = vadd.f32 %v435, 1.0
    %v437 = vmul.f32 %v436, %v436
    %v438 = vsub.f32 %v437, 1.0
    %v439 = vadd.f32 %v437, 1.0
    %v440 = vrcp.pop %v439
    %v441 = vmul.f32 %v438, %v440
    %vm442 = vcmp.gt.f32.partialorder %v431, 20.0
    %v443 = vmul.f32 %v431, %v441
    %v444 = vsel %vm442, %v431, %v443
    %445 = vst [vmem:[#allocation2 + $0x10] sm:$0xff] %v444
    %s446 = scalar_lea.vmem [#allocation6], 1280
    %v447 = vld [vmem:[%s446] sm:$0xff]
    %v448 = vld [vmem:[%s446 + $0x8] sm:$0xff]
    %v449 = vld [vmem:[%s446 + $0x10] sm:$0xff]
    %v450 = vld [vmem:[%s446 + $0x18] sm:$0xff]
    %v451 = vld [vmem:[%s446 + $0x20] sm:$0xff]
    %v452 = vld [vmem:[%s446 + $0x28] sm:$0xff]
    %v453 = vld [vmem:[%s446 + $0x30] sm:$0xff]
    %v454 = vld [vmem:[%s446 + $0x38] sm:$0xff]
    %v455 = vld [vmem:[%s446 + $0x40] sm:$0xff]
    %v456 = vld [vmem:[%s446 + $0x48] sm:$0xff]
    %v457 = vld [vmem:[%s446 + $0x50] sm:$0xff]
    %v458 = vld [vmem:[%s446 + $0x58] sm:$0xff]
    %v459 = vld [vmem:[%s446 + $0x60] sm:$0xff]
    %v460 = vld [vmem:[%s446 + $0x68] sm:$0xff]
    %v461 = vld [vmem:[%s446 + $0x70] sm:$0xff]
    %v462 = vld [vmem:[%s446 + $0x78] sm:$0xff]
    %v463 = vld [vmem:[%s446 + $0x80] sm:$0xff]
    %v464 = vld [vmem:[%s446 + $0x88] sm:$0xff]
    %v465 = vld [vmem:[%s446 + $0x90] sm:$0xff]
    %v466 = vld [vmem:[%s446 + $0x98] sm:$0xff]
    %v467 = vld [vmem:[%s446 + $0xa0] sm:$0xff]
    %v468 = vld [vmem:[%s446 + $0xa8] sm:$0xff]
    %v469 = vld [vmem:[%s446 + $0xb0] sm:$0xff]
    %v470 = vld [vmem:[%s446 + $0xb8] sm:$0xff]
    %v471 = vld [vmem:[%s446 + $0xc0] sm:$0xff]
    %v472 = vld [vmem:[%s446 + $0xc8] sm:$0xff]
    %v473 = vld [vmem:[%s446 + $0xd0] sm:$0xff]
    %v474 = vld [vmem:[%s446 + $0xd8] sm:$0xff]
    %v475 = vld [vmem:[%s446 + $0xe0] sm:$0xff]
    %v476 = vld [vmem:[%s446 + $0xe8] sm:$0xff]
    %v477 = vld [vmem:[%s446 + $0xf0] sm:$0xff]
    %v478 = vld [vmem:[%s446 + $0xf8] sm:$0xff]
    %v479 = vld [vmem:[%s446 + $0x100] sm:$0xff]
    %v480 = vld [vmem:[%s446 + $0x108] sm:$0xff]
    %v481 = vld [vmem:[%s446 + $0x110] sm:$0xff]
    %v482 = vld [vmem:[%s446 + $0x118] sm:$0xff]
    %v483 = vld [vmem:[%s446 + $0x120] sm:$0xff]
    %v484 = vld [vmem:[%s446 + $0x128] sm:$0xff]
    %v485 = vld [vmem:[%s446 + $0x130] sm:$0xff]
    %v486 = vld [vmem:[%s446 + $0x138] sm:$0xff]
    %v487 = vld [vmem:[%s446 + $0x140] sm:$0xff]
    %v488 = vld [vmem:[%s446 + $0x148] sm:$0xff]
    %v489 = vld [vmem:[%s446 + $0x150] sm:$0xff]
    %v490 = vld [vmem:[%s446 + $0x158] sm:$0xff]
    %v491 = vld [vmem:[%s446 + $0x160] sm:$0xff]
    %v492 = vld [vmem:[%s446 + $0x168] sm:$0xff]
    %v493 = vld [vmem:[%s446 + $0x170] sm:$0xff]
    %v494 = vld [vmem:[%s446 + $0x178] sm:$0xff]
    %v495 = vld [vmem:[%s446 + $0x180] sm:$0xff]
    %v496 = vld [vmem:[%s446 + $0x188] sm:$0xff]
    %v497 = vld [vmem:[%s446 + $0x190] sm:$0xff]
    %v498 = vld [vmem:[%s446 + $0x198] sm:$0xff]
    %v499 = vld [vmem:[%s446 + $0x1a0] sm:$0xff]
    %v500 = vld [vmem:[%s446 + $0x1a8] sm:$0xff]
    %v501 = vld [vmem:[%s446 + $0x1b0] sm:$0xff]
    %v502 = vld [vmem:[%s446 + $0x1b8] sm:$0xff]
    %v503 = vld [vmem:[%s446 + $0x1c0] sm:$0xff]
    %v504 = vld [vmem:[%s446 + $0x1c8] sm:$0xff]
    %v505 = vld [vmem:[%s446 + $0x1d0] sm:$0xff]
    %v506 = vld [vmem:[%s446 + $0x1d8] sm:$0xff]
    %v507 = vld [vmem:[%s446 + $0x1e0] sm:$0xff]
    %v508 = vld [vmem:[%s446 + $0x1e8] sm:$0xff]
    %v509 = vld [vmem:[%s446 + $0x1f0] sm:$0xff]
    %v510 = vld [vmem:[%s446 + $0x1f8] sm:$0xff]
    %v511 = vld [vmem:[%s446 + $0x200] sm:$0xff]
    %v512 = vld [vmem:[%s446 + $0x208] sm:$0xff]
    %v513 = vld [vmem:[%s446 + $0x210] sm:$0xff]
    %v514 = vld [vmem:[%s446 + $0x218] sm:$0xff]
    %v515 = vld [vmem:[%s446 + $0x220] sm:$0xff]
    %v516 = vld [vmem:[%s446 + $0x228] sm:$0xff]
    %v517 = vld [vmem:[%s446 + $0x230] sm:$0xff]
    %v518 = vld [vmem:[%s446 + $0x238] sm:$0xff]
    %v519 = vld [vmem:[%s446 + $0x240] sm:$0xff]
    %v520 = vld [vmem:[%s446 + $0x248] sm:$0xff]
    %v521 = vld [vmem:[%s446 + $0x250] sm:$0xff]
    %v522 = vld [vmem:[%s446 + $0x258] sm:$0xff]
    %v523 = vld [vmem:[%s446 + $0x260] sm:$0xff]
    %v524 = vld [vmem:[%s446 + $0x268] sm:$0xff]
    %v525 = vld [vmem:[%s446 + $0x270] sm:$0xff]
    %v526 = vld [vmem:[%s446 + $0x278] sm:$0xff]
    %v527 = vld [vmem:[#allocation2] sm:$0xff]
    %v528 = vld [vmem:[#allocation2 + $0x8] sm:$0xff]
    %v529 = vld [vmem:[#allocation2 + $0x10] sm:$0xff]
    %v530 = vld [vmem:[#allocation2 + $0x18] sm:$0xff]
    %v531 = vld [vmem:[#allocation2 + $0x20] sm:$0xff]
    %532 = vmatpush.msra.mxu0 %v462
    %533 = vmatpush.msra.mxu0 %v461
    %534 = vmatpush.msra.mxu0 %v460
    %535 = vmatpush.msra.mxu0 %v459
    %536 = vmatpush.msra.mxu0 %v458
    %537 = vmatpush.msra.mxu0 %v457
    %538 = vmatpush.msra.mxu0 %v456
    %539 = vmatpush.msra.mxu0 %v455
    %540 = vmatpush.msra.mxu0 %v454
    %541 = vmatpush.msra.mxu0 %v453
    %542 = vmatpush.msra.mxu0 %v452
    %543 = vmatpush.msra.mxu0 %v451
    %544 = vmatpush.msra.mxu0 %v450
    %545 = vmatpush.msra.mxu0 %v449
    %546 = vmatpush.msra.mxu0 %v448
    %547 = vmatpush.msra.mxu0 %v447
    %548 = vmatmul.f32.gmra.mxu0 %v527
    %v549 = vpop.f32.mrf.mxu0
    %v550 = vadd.f32 0.0, %v549
    %551 = vdwg.mxu0
    %552 = vmatpush.msra.mxu0 %v478
    %553 = vmatpush.msra.mxu0 %v477
    %554 = vmatpush.msra.mxu0 %v476
    %555 = vmatpush.msra.mxu0 %v475
    %556 = vmatpush.msra.mxu0 %v474
    %557 = vmatpush.msra.mxu0 %v473
    %558 = vmatpush.msra.mxu0 %v472
    %559 = vmatpush.msra.mxu0 %v471
    %560 = vmatpush.msra.mxu0 %v470
    %561 = vmatpush.msra.mxu0 %v469
    %562 = vmatpush.msra.mxu0 %v468
    %563 = vmatpush.msra.mxu0 %v467
    %564 = vmatpush.msra.mxu0 %v466
    %565 = vmatpush.msra.mxu0 %v465
    %566 = vmatpush.msra.mxu0 %v464
    %567 = vmatpush.msra.mxu0 %v463
    %568 = vmatmul.f32.gmra.mxu0 %v528
    %v569 = vpop.f32.mrf.mxu0
    %v570 = vadd.f32 %v550, %v569
    %571 = vdwg.mxu0
    %572 = vmatpush.msra.mxu0 %v494
    %573 = vmatpush.msra.mxu0 %v493
    %574 = vmatpush.msra.mxu0 %v492
    %575 = vmatpush.msra.mxu0 %v491
    %576 = vmatpush.msra.mxu0 %v490
    %577 = vmatpush.msra.mxu0 %v489
    %578 = vmatpush.msra.mxu0 %v488
    %579 = vmatpush.msra.mxu0 %v487
    %580 = vmatpush.msra.mxu0 %v486
    %581 = vmatpush.msra.mxu0 %v485
    %582 = vmatpush.msra.mxu0 %v484
    %583 = vmatpush.msra.mxu0 %v483
    %584 = vmatpush.msra.mxu0 %v482
    %585 = vmatpush.msra.mxu0 %v481
    %586 = vmatpush.msra.mxu0 %v480
    %587 = vmatpush.msra.mxu0 %v479
    %588 = vmatmul.f32.gmra.mxu0 %v529
    %v589 = vpop.f32.mrf.mxu0
    %v590 = vadd.f32 %v570, %v589
    %591 = vdwg.mxu0
    %592 = vmatpush.msra.mxu0 %v510
    %593 = vmatpush.msra.mxu0 %v509
    %594 = vmatpush.msra.mxu0 %v508
    %595 = vmatpush.msra.mxu0 %v507
    %596 = vmatpush.msra.mxu0 %v506
    %597 = vmatpush.msra.mxu0 %v505
    %598 = vmatpush.msra.mxu0 %v504
    %599 = vmatpush.msra.mxu0 %v503
    %600 = vmatpush.msra.mxu0 %v502
    %601 = vmatpush.msra.mxu0 %v501
    %602 = vmatpush.msra.mxu0 %v500
    %603 = vmatpush.msra.mxu0 %v499
    %604 = vmatpush.msra.mxu0 %v498
    %605 = vmatpush.msra.mxu0 %v497
    %606 = vmatpush.msra.mxu0 %v496
    %607 = vmatpush.msra.mxu0 %v495
    %608 = vmatmul.f32.gmra.mxu0 %v530
    %v609 = vpop.f32.mrf.mxu0
    %v610 = vadd.f32 %v590, %v609
    %611 = vdwg.mxu0
    %612 = vmatpush.msra.mxu0 %v526
    %613 = vmatpush.msra.mxu0 %v525
    %614 = vmatpush.msra.mxu0 %v524
    %615 = vmatpush.msra.mxu0 %v523
    %616 = vmatpush.msra.mxu0 %v522
    %617 = vmatpush.msra.mxu0 %v521
    %618 = vmatpush.msra.mxu0 %v520
    %619 = vmatpush.msra.mxu0 %v519
    %620 = vmatpush.msra.mxu0 %v518
    %621 = vmatpush.msra.mxu0 %v517
    %622 = vmatpush.msra.mxu0 %v516
    %623 = vmatpush.msra.mxu0 %v515
    %624 = vmatpush.msra.mxu0 %v514
    %625 = vmatpush.msra.mxu0 %v513
    %626 = vmatpush.msra.mxu0 %v512
    %627 = vmatpush.msra.mxu0 %v511
    %628 = vmatmul.f32.gmra.mxu0 %v531
    %v629 = vpop.f32.mrf.mxu0
    %v630 = vadd.f32 %v610, %v629
    %631 = vdwg.mxu0
    %v632 = vmin.f32 %v630, 20.0
    %v633 = vmul.f32 %v632, 1.442695
    %v634 = vpow.pop %v633
    %v635 = vadd.f32 %v634, 1.0
    %v636 = vmul.f32 %v635, %v635
    %v637 = vsub.f32 %v636, 1.0
    %v638 = vadd.f32 %v636, 1.0
    %v639 = vrcp.pop %v638
    %v640 = vmul.f32 %v637, %v639
    %vm641 = vcmp.gt.f32.partialorder %v630, 20.0
    %v642 = vmul.f32 %v630, %v640
    %v643 = vsel %vm641, %v630, %v642
    %644 = vst [vmem:[#allocation2 + $0x18] sm:$0xff] %v643
    %s645 = scalar_lea.vmem [#allocation6], 1920
    %v646 = vld [vmem:[%s645] sm:$0xff]
    %v647 = vld [vmem:[%s645 + $0x8] sm:$0xff]
    %v648 = vld [vmem:[%s645 + $0x10] sm:$0xff]
    %v649 = vld [vmem:[%s645 + $0x18] sm:$0xff]
    %v650 = vld [vmem:[%s645 + $0x20] sm:$0xff]
    %v651 = vld [vmem:[%s645 + $0x28] sm:$0xff]
    %v652 = vld [vmem:[%s645 + $0x30] sm:$0xff]
    %v653 = vld [vmem:[%s645 + $0x38] sm:$0xff]
    %v654 = vld [vmem:[%s645 + $0x40] sm:$0xff]
    %v655 = vld [vmem:[%s645 + $0x48] sm:$0xff]
    %v656 = vld [vmem:[%s645 + $0x50] sm:$0xff]
    %v657 = vld [vmem:[%s645 + $0x58] sm:$0xff]
    %v658 = vld [vmem:[%s645 + $0x60] sm:$0xff]
    %v659 = vld [vmem:[%s645 + $0x68] sm:$0xff]
    %v660 = vld [vmem:[%s645 + $0x70] sm:$0xff]
    %v661 = vld [vmem:[%s645 + $0x78] sm:$0xff]
    %v662 = vld [vmem:[%s645 + $0x80] sm:$0xff]
    %v663 = vld [vmem:[%s645 + $0x88] sm:$0xff]
    %v664 = vld [vmem:[%s645 + $0x90] sm:$0xff]
    %v665 = vld [vmem:[%s645 + $0x98] sm:$0xff]
    %v666 = vld [vmem:[%s645 + $0xa0] sm:$0xff]
    %v667 = vld [vmem:[%s645 + $0xa8] sm:$0xff]
    %v668 = vld [vmem:[%s645 + $0xb0] sm:$0xff]
    %v669 = vld [vmem:[%s645 + $0xb8] sm:$0xff]
    %v670 = vld [vmem:[%s645 + $0xc0] sm:$0xff]
    %v671 = vld [vmem:[%s645 + $0xc8] sm:$0xff]
    %v672 = vld [vmem:[%s645 + $0xd0] sm:$0xff]
    %v673 = vld [vmem:[%s645 + $0xd8] sm:$0xff]
    %v674 = vld [vmem:[%s645 + $0xe0] sm:$0xff]
    %v675 = vld [vmem:[%s645 + $0xe8] sm:$0xff]
    %v676 = vld [vmem:[%s645 + $0xf0] sm:$0xff]
    %v677 = vld [vmem:[%s645 + $0xf8] sm:$0xff]
    %v678 = vld [vmem:[%s645 + $0x100] sm:$0xff]
    %v679 = vld [vmem:[%s645 + $0x108] sm:$0xff]
    %v680 = vld [vmem:[%s645 + $0x110] sm:$0xff]
    %v681 = vld [vmem:[%s645 + $0x118] sm:$0xff]
    %v682 = vld [vmem:[%s645 + $0x120] sm:$0xff]
    %v683 = vld [vmem:[%s645 + $0x128] sm:$0xff]
    %v684 = vld [vmem:[%s645 + $0x130] sm:$0xff]
    %v685 = vld [vmem:[%s645 + $0x138] sm:$0xff]
    %v686 = vld [vmem:[%s645 + $0x140] sm:$0xff]
    %v687 = vld [vmem:[%s645 + $0x148] sm:$0xff]
    %v688 = vld [vmem:[%s645 + $0x150] sm:$0xff]
    %v689 = vld [vmem:[%s645 + $0x158] sm:$0xff]
    %v690 = vld [vmem:[%s645 + $0x160] sm:$0xff]
    %v691 = vld [vmem:[%s645 + $0x168] sm:$0xff]
    %v692 = vld [vmem:[%s645 + $0x170] sm:$0xff]
    %v693 = vld [vmem:[%s645 + $0x178] sm:$0xff]
    %v694 = vld [vmem:[%s645 + $0x180] sm:$0xff]
    %v695 = vld [vmem:[%s645 + $0x188] sm:$0xff]
    %v696 = vld [vmem:[%s645 + $0x190] sm:$0xff]
    %v697 = vld [vmem:[%s645 + $0x198] sm:$0xff]
    %v698 = vld [vmem:[%s645 + $0x1a0] sm:$0xff]
    %v699 = vld [vmem:[%s645 + $0x1a8] sm:$0xff]
    %v700 = vld [vmem:[%s645 + $0x1b0] sm:$0xff]
    %v701 = vld [vmem:[%s645 + $0x1b8] sm:$0xff]
    %v702 = vld [vmem:[%s645 + $0x1c0] sm:$0xff]
    %v703 = vld [vmem:[%s645 + $0x1c8] sm:$0xff]
    %v704 = vld [vmem:[%s645 + $0x1d0] sm:$0xff]
    %v705 = vld [vmem:[%s645 + $0x1d8] sm:$0xff]
    %v706 = vld [vmem:[%s645 + $0x1e0] sm:$0xff]
    %v707 = vld [vmem:[%s645 + $0x1e8] sm:$0xff]
    %v708 = vld [vmem:[%s645 + $0x1f0] sm:$0xff]
    %v709 = vld [vmem:[%s645 + $0x1f8] sm:$0xff]
    %v710 = vld [vmem:[%s645 + $0x200] sm:$0xff]
    %v711 = vld [vmem:[%s645 + $0x208] sm:$0xff]
    %v712 = vld [vmem:[%s645 + $0x210] sm:$0xff]
    %v713 = vld [vmem:[%s645 + $0x218] sm:$0xff]
    %v714 = vld [vmem:[%s645 + $0x220] sm:$0xff]
    %v715 = vld [vmem:[%s645 + $0x228] sm:$0xff]
    %v716 = vld [vmem:[%s645 + $0x230] sm:$0xff]
    %v717 = vld [vmem:[%s645 + $0x238] sm:$0xff]
    %v718 = vld [vmem:[%s645 + $0x240] sm:$0xff]
    %v719 = vld [vmem:[%s645 + $0x248] sm:$0xff]
    %v720 = vld [vmem:[%s645 + $0x250] sm:$0xff]
    %v721 = vld [vmem:[%s645 + $0x258] sm:$0xff]
    %v722 = vld [vmem:[%s645 + $0x260] sm:$0xff]
    %v723 = vld [vmem:[%s645 + $0x268] sm:$0xff]
    %v724 = vld [vmem:[%s645 + $0x270] sm:$0xff]
    %v725 = vld [vmem:[%s645 + $0x278] sm:$0xff]
    %v726 = vld [vmem:[#allocation2] sm:$0xff]
    %v727 = vld [vmem:[#allocation2 + $0x8] sm:$0xff]
    %v728 = vld [vmem:[#allocation2 + $0x10] sm:$0xff]
    %v729 = vld [vmem:[#allocation2 + $0x18] sm:$0xff]
    %v730 = vld [vmem:[#allocation2 + $0x20] sm:$0xff]
    %731 = vmatpush.msra.mxu0 %v661
    %732 = vmatpush.msra.mxu0 %v660
    %733 = vmatpush.msra.mxu0 %v659
    %734 = vmatpush.msra.mxu0 %v658
    %735 = vmatpush.msra.mxu0 %v657
    %736 = vmatpush.msra.mxu0 %v656
    %737 = vmatpush.msra.mxu0 %v655
    %738 = vmatpush.msra.mxu0 %v654
    %739 = vmatpush.msra.mxu0 %v653
    %740 = vmatpush.msra.mxu0 %v652
    %741 = vmatpush.msra.mxu0 %v651
    %742 = vmatpush.msra.mxu0 %v650
    %743 = vmatpush.msra.mxu0 %v649
    %744 = vmatpush.msra.mxu0 %v648
    %745 = vmatpush.msra.mxu0 %v647
    %746 = vmatpush.msra.mxu0 %v646
    %747 = vmatmul.f32.gmra.mxu0 %v726
    %v748 = vpop.f32.mrf.mxu0
    %v749 = vadd.f32 0.0, %v748
    %750 = vdwg.mxu0
    %751 = vmatpush.msra.mxu0 %v677
    %752 = vmatpush.msra.mxu0 %v676
    %753 = vmatpush.msra.mxu0 %v675
    %754 = vmatpush.msra.mxu0 %v674
    %755 = vmatpush.msra.mxu0 %v673
    %756 = vmatpush.msra.mxu0 %v672
    %757 = vmatpush.msra.mxu0 %v671
    %758 = vmatpush.msra.mxu0 %v670
    %759 = vmatpush.msra.mxu0 %v669
    %760 = vmatpush.msra.mxu0 %v668
    %761 = vmatpush.msra.mxu0 %v667
    %762 = vmatpush.msra.mxu0 %v666
    %763 = vmatpush.msra.mxu0 %v665
    %764 = vmatpush.msra.mxu0 %v664
    %765 = vmatpush.msra.mxu0 %v663
    %766 = vmatpush.msra.mxu0 %v662
    %767 = vmatmul.f32.gmra.mxu0 %v727
    %v768 = vpop.f32.mrf.mxu0
    %v769 = vadd.f32 %v749, %v768
    %770 = vdwg.mxu0
    %771 = vmatpush.msra.mxu0 %v693
    %772 = vmatpush.msra.mxu0 %v692
    %773 = vmatpush.msra.mxu0 %v691
    %774 = vmatpush.msra.mxu0 %v690
    %775 = vmatpush.msra.mxu0 %v689
    %776 = vmatpush.msra.mxu0 %v688
    %777 = vmatpush.msra.mxu0 %v687
    %778 = vmatpush.msra.mxu0 %v686
    %779 = vmatpush.msra.mxu0 %v685
    %780 = vmatpush.msra.mxu0 %v684
    %781 = vmatpush.msra.mxu0 %v683
    %782 = vmatpush.msra.mxu0 %v682
    %783 = vmatpush.msra.mxu0 %v681
    %784 = vmatpush.msra.mxu0 %v680
    %785 = vmatpush.msra.mxu0 %v679
    %786 = vmatpush.msra.mxu0 %v678
    %787 = vmatmul.f32.gmra.mxu0 %v728
    %v788 = vpop.f32.mrf.mxu0
    %v789 = vadd.f32 %v769, %v788
    %790 = vdwg.mxu0
    %791 = vmatpush.msra.mxu0 %v709
    %792 = vmatpush.msra.mxu0 %v708
    %793 = vmatpush.msra.mxu0 %v707
    %794 = vmatpush.msra.mxu0 %v706
    %795 = vmatpush.msra.mxu0 %v705
    %796 = vmatpush.msra.mxu0 %v704
    %797 = vmatpush.msra.mxu0 %v703
    %798 = vmatpush.msra.mxu0 %v702
    %799 = vmatpush.msra.mxu0 %v701
    %800 = vmatpush.msra.mxu0 %v700
    %801 = vmatpush.msra.mxu0 %v699
    %802 = vmatpush.msra.mxu0 %v698
    %803 = vmatpush.msra.mxu0 %v697
    %804 = vmatpush.msra.mxu0 %v696
    %805 = vmatpush.msra.mxu0 %v695
    %806 = vmatpush.msra.mxu0 %v694
    %807 = vmatmul.f32.gmra.mxu0 %v729
    %v808 = vpop.f32.mrf.mxu0
    %v809 = vadd.f32 %v789, %v808
    %810 = vdwg.mxu0
    %811 = vmatpush.msra.mxu0 %v725
    %812 = vmatpush.msra.mxu0 %v724
    %813 = vmatpush.msra.mxu0 %v723
    %814 = vmatpush.msra.mxu0 %v722
    %815 = vmatpush.msra.mxu0 %v721
    %816 = vmatpush.msra.mxu0 %v720
    %817 = vmatpush.msra.mxu0 %v719
    %818 = vmatpush.msra.mxu0 %v718
    %819 = vmatpush.msra.mxu0 %v717
    %820 = vmatpush.msra.mxu0 %v716
    %821 = vmatpush.msra.mxu0 %v715
    %822 = vmatpush.msra.mxu0 %v714
    %823 = vmatpush.msra.mxu0 %v713
    %824 = vmatpush.msra.mxu0 %v712
    %825 = vmatpush.msra.mxu0 %v711
    %826 = vmatpush.msra.mxu0 %v710
    %827 = vmatmul.f32.gmra.mxu0 %v730
    %v828 = vpop.f32.mrf.mxu0
    %v829 = vadd.f32 %v809, %v828
    %830 = vdwg.mxu0
    %v831 = vmin.f32 %v829, 20.0
    %v832 = vmul.f32 %v831, 1.442695
    %v833 = vpow.pop %v832
    %v834 = vadd.f32 %v833, 1.0
    %v835 = vmul.f32 %v834, %v834
    %v836 = vsub.f32 %v835, 1.0
    %v837 = vadd.f32 %v835, 1.0
    %v838 = vrcp.pop %v837
    %v839 = vmul.f32 %v836, %v838
    %vm840 = vcmp.gt.f32.partialorder %v829, 20.0
    %v841 = vmul.f32 %v829, %v839
    %v842 = vsel %vm840, %v829, %v841
    %843 = vst [vmem:[#allocation2 + $0x20] sm:$0xff] %v842
    %v844 = vld [vmem:[#allocation2 + $0x20] sm:$0xff]
    %845 = vst [vmem:[#allocation8] sm:$0xff] %v844
    // Predicated region
    $region18: #{tpu_custom_call.1} parent=1 // pred_check
      _
    $region19: #{tpu_custom_call.1} parent=1 // pred_check_branch
      %847 = sbr.rel (0) target = $region21
    $region20: #{tpu_custom_call.1} parent=1 // pred_region
      %849 = vsyncadd [#allocation5], 0
      %s851 = sshll.u32 [#allocation8], 4
      %s852 = int_to_ptr.vmem [resolvable:$true] %s851
      %s853 = sshll.u32 %s2, 4
      %s854 = int_to_ptr.hbm [resolvable:$true] %s853
      %856 = dma.vmem_to_hbm [thread:$0]  %s852, 128, %s854, [#allocation5]
    $region21: #{tpu_custom_call.1} parent=1 // pred_fallthru
      _
    // Predicated region
    $region22: #{tpu_custom_call.1} parent=1 // pred_check
      _
    $region23: #{tpu_custom_call.1} parent=1 // pred_check_branch
      %858 = sbr.rel (0) target = $region25
    $region24: #{tpu_custom_call.1} parent=1 // pred_region
      %860 = dma.done [#allocation5], 128
    $region25: #{tpu_custom_call.1} parent=1 // pred_fallthru
      _
    %861 = vsyncpa [#allocation4], 1
    %862 = vsyncpa [#allocation7], 1
    %863 = vsyncpa [#allocation5], 1

</llo_original>
